<compile_context>
chip_gen: v7x
topology: tpu7x:2x2x1
jax: 0.10.0
libtpu: 0.0.40
codegen_flags: <defaults>
</compile_context>

<pallas_src>
import functools
import math

import jax
import jax.numpy as jnp
from jax.experimental import pallas as pl
from jax.experimental.pallas import tpu as pltpu

INV_SQRT_2 = 1.0 / math.sqrt(2.0)


def _mid_side_kernel(x_ref, mid_ref, side_ref, *, normalize: bool):
    # x_ref: (1, 2, TL) tile in VMEM.  Read the two channel rows directly.
    left = x_ref[0, 0, :]
    right = x_ref[0, 1, :]
    if normalize:
        scale = jnp.asarray(INV_SQRT_2, dtype=left.dtype)
        left = left * scale
        right = right * scale
    mid_ref[0, 0, :] = left + right
    side_ref[0, 0, :] = left - right


def stereo_to_mid_side(input_signals: jax.Array, normalize: bool = True,
                       tl: int = 32768):
    """input_signals: (B, 2, L) float array -> (mid, side), each (B, 1, L)."""
    B, C, L = input_signals.shape
    assert C == 2, "input must be stereo (channel dim == 2)"

    # Time tile: large to amortize per-grid-step overhead (mem-bound kernel),
    # but clamped to L (block == full dim is always legal).  When tiling, the
    # tile must be a multiple of the 128-wide lane dimension.
    if L <= tl:
        tl = L
    else:
        assert tl % 128 == 0, "time tile must be a multiple of 128"

    grid = (B, pl.cdiv(L, tl))  # masked tail handles L % tl != 0

    in_spec = pl.BlockSpec((1, 2, tl), lambda b, t: (b, 0, t))
    out_spec = pl.BlockSpec((1, 1, tl), lambda b, t: (b, 0, t))

    kernel = functools.partial(_mid_side_kernel, normalize=normalize)

    mid, side = pl.pallas_call(
        kernel,
        out_shape=(
            jax.ShapeDtypeStruct((B, 1, L), input_signals.dtype),
            jax.ShapeDtypeStruct((B, 1, L), input_signals.dtype),
        ),
        grid=grid,
        in_specs=[in_spec],
        out_specs=(out_spec, out_spec),
        compiler_params=pltpu.CompilerParams(
            dimension_semantics=("parallel", "parallel")
        ),
    )(input_signals)
    return mid, side


def _reference(x, normalize=True):
    if normalize:
        x = x * INV_SQRT_2
    left, right = x[:, 0:1, :], x[:, 1:2, :]
    return left + right, left - right


if __name__ == "__main__":
    key = jax.random.PRNGKey(0)

    # Main test: audio-like length that does NOT divide the 32K tile
    # (exercises the pl.cdiv masked-tail path).
    B, C, L = 2, 2, 48000
    k0, k1 = jax.random.split(key)
    x = jax.random.normal(k0, (B, C, L), dtype=jnp.float32)

    mid, side = stereo_to_mid_side(x, normalize=True)
    jax.block_until_ready((mid, side))
    mid_ref, side_ref = _reference(x, normalize=True)
    assert mid.shape == (B, 1, L) and side.shape == (B, 1, L)
    assert jnp.allclose(mid, mid_ref, atol=1e-6)
    assert jnp.allclose(side, side_ref, atol=1e-6)

    # Small test: L smaller than the tile (block == full dim), normalize=False.
    x_small = jax.random.normal(k1, (B, C, 256), dtype=jnp.float32)
    mid_s, side_s = stereo_to_mid_side(x_small, normalize=False)
    jax.block_until_ready((mid_s, side_s))
    mid_s_ref, side_s_ref = _reference(x_small, normalize=False)
    assert jnp.allclose(mid_s, mid_s_ref, atol=1e-6)
    assert jnp.allclose(side_s, side_s_ref, atol=1e-6)

    print("KERNEL_OK")
</pallas_src>

<mosaic_0001>
module attributes {stable_mosaic.version = 11 : i64} {
  func.func @_mid_side_kernel(%arg0: i32, %arg1: i32, %arg2: memref<1x2x32768xf32, #tpu.memory_space<vmem>>, %arg3: memref<1x1x32768xf32, #tpu.memory_space<vmem>>, %arg4: memref<1x1x32768xf32, #tpu.memory_space<vmem>>) attributes {dimension_semantics = [#tpu.dimension_semantics<parallel>, #tpu.dimension_semantics<parallel>], iteration_bounds = array<i64: 2, 2>, scalar_prefetch = 0 : i64, scratch_operands = 0 : i64, tpu.core_type = #tpu.core_type<tc>, window_params = [{transform_indices = @transform_0, window_bounds = array<i64: 1, 2, 32768>}, {transform_indices = @transform_1, window_bounds = array<i64: 1, 1, 32768>}, {transform_indices = @transform_2, window_bounds = array<i64: 1, 1, 32768>}]} {
    %c0 = arith.constant 0 : index
    %c0_0 = arith.constant 0 : index
    %c0_1 = arith.constant 0 : index
    %0 = vector.load %arg2[%c0, %c0_0, %c0_1] : memref<1x2x32768xf32, #tpu.memory_space<vmem>>, vector<1x1x32768xf32>
    %1 = vector.shape_cast %0 : vector<1x1x32768xf32> to vector<32768xf32>
    %c0_2 = arith.constant 0 : index
    %c1 = arith.constant 1 : index
    %c0_3 = arith.constant 0 : index
    %2 = vector.load %arg2[%c0_2, %c1, %c0_3] : memref<1x2x32768xf32, #tpu.memory_space<vmem>>, vector<1x1x32768xf32>
    %3 = vector.shape_cast %2 : vector<1x1x32768xf32> to vector<32768xf32>
    %cst = arith.constant 0.707106769 : f32
    %4 = vector.broadcast %cst : f32 to vector<32768xf32>
    %5 = arith.mulf %1, %4 : vector<32768xf32>
    %cst_4 = arith.constant 0.707106769 : f32
    %6 = vector.broadcast %cst_4 : f32 to vector<32768xf32>
    %7 = arith.mulf %3, %6 : vector<32768xf32>
    %8 = arith.addf %5, %7 : vector<32768xf32>
    %c0_5 = arith.constant 0 : index
    %c0_6 = arith.constant 0 : index
    %c0_7 = arith.constant 0 : index
    %9 = vector.load %arg3[%c0_5, %c0_6, %c0_7] : memref<1x1x32768xf32, #tpu.memory_space<vmem>>, vector<1x1x32768xf32>
    %10 = vector.shape_cast %9 : vector<1x1x32768xf32> to vector<32768xf32>
    %11 = vector.shape_cast %8 : vector<32768xf32> to vector<1x1x32768xf32>
    tpu.vector_store %arg3[%c0_5, %c0_6, %c0_7], %11 {strides = array<i32>} : memref<1x1x32768xf32, #tpu.memory_space<vmem>>, vector<1x1x32768xf32>,
    %12 = arith.subf %5, %7 : vector<32768xf32>
    %c0_8 = arith.constant 0 : index
    %c0_9 = arith.constant 0 : index
    %c0_10 = arith.constant 0 : index
    %13 = vector.load %arg4[%c0_8, %c0_9, %c0_10] : memref<1x1x32768xf32, #tpu.memory_space<vmem>>, vector<1x1x32768xf32>
    %14 = vector.shape_cast %13 : vector<1x1x32768xf32> to vector<32768xf32>
    %15 = vector.shape_cast %12 : vector<32768xf32> to vector<1x1x32768xf32>
    tpu.vector_store %arg4[%c0_8, %c0_9, %c0_10], %15 {strides = array<i32>} : memref<1x1x32768xf32, #tpu.memory_space<vmem>>, vector<1x1x32768xf32>,
    return
  }
  func.func @transform_0(%arg0: i32, %arg1: i32) -> (i32, i32, i32) {
    %c0_i32 = arith.constant 0 : i32
    %c0_i32_0 = arith.constant 0 : i32
    return %arg0, %c0_i32, %arg1 : i32, i32, i32
  }
  func.func @transform_1(%arg0: i32, %arg1: i32) -> (i32, i32, i32) {
    %c0_i32 = arith.constant 0 : i32
    %c0_i32_0 = arith.constant 0 : i32
    return %arg0, %c0_i32, %arg1 : i32, i32, i32
  }
  func.func @transform_2(%arg0: i32, %arg1: i32) -> (i32, i32, i32) {
    %c0_i32 = arith.constant 0 : i32
    %c0_i32_0 = arith.constant 0 : i32
    return %arg0, %c0_i32, %arg1 : i32, i32, i32
  }
}

</mosaic_0001>

<llo_original>
// kernel: tpu_custom_call.1
$region0: #{tpu_custom_call.1}
  #allocation0 [shape = 'u32[]', space=smem, size = 0x4, offset = 0x4, fixed_abs, tag = 'smem constant byte address 0x4 - core index']
  #allocation1 [shape = 'u32[144,128]{1,0:T(1,128)}', space=vmem, size = 0x12000, scoped, tag = 'internal scratch']
  %s0 = inlined_call_operand.hbm [shape: f32[2,2,48000], index: 0, kind: input, shape index: {}]
  %s1 = inlined_call_operand.hbm [shape: f32[2,1,48000], index: 1, kind: output, shape index: {0}]
  %s2 = inlined_call_operand.hbm [shape: f32[2,1,48000], index: 2, kind: output, shape index: {1}]
  %3 = xla_tuple %s1, %s2
  %s4 = sld [smem:[#allocation0]]
  $region49: #{tpu_custom_call.1} parent=0
    _
  %s6 = ssub.s32 1, %s4
  %s7 = scalar_select 0, %s6, %s4
  $region1: #{tpu_custom_call.1} parent=0
    #allocation2 [shape = 'u8[524288]{0}', space=vmem, size = 0x80000, scoped, tag = 'input window, operand 0']
    #allocation3 [shape = 's32[2]{0}', space=sflag, size = 0x8, scoped, tag = 'scoped memory for tpu_custom_call.1']
    #allocation4 [shape = 's32[2]{0}', space=sflag, size = 0x8, scoped, tag = 'scoped memory for tpu_custom_call.1']
    #allocation5 [shape = 'u8[262144]{0}', space=vmem, size = 0x40000, scoped, tag = 'output window, operand 0']
    #allocation6 [shape = 'u8[262144]{0}', space=vmem, size = 0x40000, scoped, tag = 'output window, operand 1']
    #allocation7 [shape = 's32[2]{0}', space=sflag, size = 0x8, scoped, tag = 'scoped memory for tpu_custom_call.1']
    %8 = vsyncpa [#allocation3], 0
    %s9 = scalar_lea.sflag [#allocation3], 1
    %10 = vsyncpa %s9, 0
    %11 = vsyncpa [#allocation4], 0
    %s12 = scalar_lea.sflag [#allocation4], 1
    %13 = vsyncpa %s12, 0
    %14 = vsyncpa [#allocation7], 0
    %s15 = scalar_lea.sflag [#allocation7], 1
    %16 = vsyncpa %s15, 0
    loop: start=0, step=1, limit=6
    $region2: #{tpu_custom_call.1} parent=1 // loop_pre_header
      _
    $region3: #{tpu_custom_call.1} parent=1 // loop_header
      %s18 = sphi 0, %s22
      %p19 = scmp.ge.s32.totalorder %s18, 6
      %s25 = sphi 0, %s37
      %s26 = sphi 0, %s33
      %s27 = sphi 0, %s25
      %s28 = sphi 0, %s26
      %s29 = sphi 0, %s27
      %s30 = sphi 0, %s28
      %s42 = sphi 0, %s44
      %s45 = sphi 0, %s42
      %s46 = sphi 0, %s45
      %s62 = sphi 0, %s46
      %s70 = sphi 0, %s72
      %s73 = sphi 0, %s70
      %s74 = sphi 0, %s73
      %s90 = sphi 0, %s74
      %s98 = sphi 0, %s100
      %s101 = sphi 0, %s98
      %s102 = sphi 0, %s101
      %s118 = sphi 0, %s102
    $region4: #{tpu_custom_call.1} parent=1 // loop_header_branch
      %21 = sbr.rel (%p19) target = $region8
    $region5: #{tpu_custom_call.1} parent=1 // loop_body
      %s23 = ssub.s32 %s18, 1
      %s24 = ssub.s32 %s18, 2
      %s31 = sadd.s32 1, %s26
      %p32 = scmp.ge.s32.totalorder %s31, 2
      %s33 = scalar_select %p32, 0, %s31
      %s34 = sadd.s32 1, %s25
      %s35 = scalar_select %p32, %s34, %s25
      %p36 = scmp.ge.s32.totalorder %s35, 2
      %s37 = scalar_select %p36, 0, %s35
      %s38 = ssub.s32 %s25, %s37
      %s39 = ssub.s32 %s26, %s33
      %s40 = sor.u32 %s38, %s39
      %p41 = scmp.eq.s32.totalorder %s40, 0
      %s43 = sadd.s32 %s42, 1
      %s44 = scalar_select %p41, %s42, %s43
      %p47 = pneg %p41
      %p48 = scmp.eq.s32.totalorder %s18, 3
      %p49 = por %p47, %p48
      %p50 = scmp.ne.s32.totalorder %s42, %s45
      %p51 = scmp.eq.s32.totalorder %s18, 0
      %p52 = por %p50, %p51
      %p53 = scmp.ne.s32.totalorder %s42, %s45
      %p54 = scmp.eq.s32.totalorder %s23, 3
      %p55 = por %p53, %p54
      %p56 = scmp.ne.s32.totalorder %s45, %s46
      %p57 = scmp.eq.s32.totalorder %s23, 0
      %p58 = por %p56, %p57
      %p59 = scmp.ne.s32.totalorder %s45, %s46
      %p60 = scmp.eq.s32.totalorder %s24, 3
      %p61 = por %p59, %p60
      %p63 = scmp.ne.s32.totalorder %s46, %s62
      %p64 = scmp.eq.s32.totalorder %s24, 0
      %p65 = por %p63, %p64
      %s66 = ssub.s32 %s25, %s37
      %s67 = ssub.s32 %s26, %s33
      %s68 = sor.u32 %s66, %s67
      %p69 = scmp.eq.s32.totalorder %s68, 0
      %s71 = sadd.s32 %s70, 1
      %s72 = scalar_select %p69, %s70, %s71
      %p75 = pneg %p69
      %p76 = scmp.eq.s32.totalorder %s18, 3
      %p77 = por %p75, %p76
      %p78 = scmp.ne.s32.totalorder %s70, %s73
      %p79 = scmp.eq.s32.totalorder %s18, 0
      %p80 = por %p78, %p79
      %p81 = scmp.ne.s32.totalorder %s70, %s73
      %p82 = scmp.eq.s32.totalorder %s23, 3
      %p83 = por %p81, %p82
      %p84 = scmp.ne.s32.totalorder %s73, %s74
      %p85 = scmp.eq.s32.totalorder %s23, 0
      %p86 = por %p84, %p85
      %p87 = scmp.ne.s32.totalorder %s73, %s74
      %p88 = scmp.eq.s32.totalorder %s24, 3
      %p89 = por %p87, %p88
      %p91 = scmp.ne.s32.totalorder %s74, %s90
      %p92 = scmp.eq.s32.totalorder %s24, 0
      %p93 = por %p91, %p92
      %s94 = ssub.s32 %s25, %s37
      %s95 = ssub.s32 %s26, %s33
      %s96 = sor.u32 %s94, %s95
      %p97 = scmp.eq.s32.totalorder %s96, 0
      %s99 = sadd.s32 %s98, 1
      %s100 = scalar_select %p97, %s98, %s99
      %p103 = pneg %p97
      %p104 = scmp.eq.s32.totalorder %s18, 3
      %p105 = por %p103, %p104
      %p106 = scmp.ne.s32.totalorder %s98, %s101
      %p107 = scmp.eq.s32.totalorder %s18, 0
      %p108 = por %p106, %p107
      %p109 = scmp.ne.s32.totalorder %s98, %s101
      %p110 = scmp.eq.s32.totalorder %s23, 3
      %p111 = por %p109, %p110
      %p112 = scmp.ne.s32.totalorder %s101, %s102
      %p113 = scmp.eq.s32.totalorder %s23, 0
      %p114 = por %p112, %p113
      %p115 = scmp.ne.s32.totalorder %s101, %s102
      %p116 = scmp.eq.s32.totalorder %s24, 3
      %p117 = por %p115, %p116
      %p119 = scmp.ne.s32.totalorder %s102, %s118
      %p120 = scmp.eq.s32.totalorder %s24, 0
      %p121 = por %p119, %p120
      %p122 = scmp.le.s32.totalorder 1, %s18
      %p123 = scmp.lt.s32.totalorder %s18, 5
      %p124 = pnand %p122, %p123
      %p125 = pneg %p124
      // Predicated region
      $region9: #{tpu_custom_call.1} parent=5 // pred_check
        _
      $region10: #{tpu_custom_call.1} parent=5 // pred_check_branch
        %127 = sbr.rel (%p124) target = $region12
      $region11: #{tpu_custom_call.1} parent=5 // pred_region
        %s128 = ssub.s32 %s18, 1
      $region12: #{tpu_custom_call.1} parent=5 // pred_fallthru
        _
      %p129 = scmp.lt.s32.totalorder %s18, 4
      // Predicated region
      $region13: #{tpu_custom_call.1} parent=5 // pred_check
        %p130 = pneg %p129
      $region14: #{tpu_custom_call.1} parent=5 // pred_check_branch
        %132 = sbr.rel (%p130) target = $region16
      $region15: #{tpu_custom_call.1} parent=5 // pred_region
        // Predicated region
        $region17: #{tpu_custom_call.1} parent=15 // pred_check
          %p133 = pneg %p52
        $region18: #{tpu_custom_call.1} parent=15 // pred_check_branch
          %135 = sbr.rel (%p133) target = $region20
        $region19: #{tpu_custom_call.1} parent=15 // pred_region
          %s136 = sand.u32 %s42, 1
          %s137 = scalar_lea.sflag [#allocation3], %s136
          %s138 = sand.u32 %s42, 1
          %s139 = smul.addr %s138, 512
          %s140 = scalar_lea.vmem [#allocation2], %s139
          %s141 = smul.u32 256, %s26
          %s142 = ssub.s32 375, %s141
          %p143 = scmp.lt.s32.totalorder %s142, 256
          %s144 = scalar_select %p143, %s142, 256
          %s145 = smul.u32 32, %s144
          %s147 = ssub.s32 8192, %s145
          %148 = vsyncadd %s137, %s147
          %p149 = scmp.ne.s32.totalorder 0, %s145
          %s150 = smul.addr %s25, 375
          %s151 = sadd.s32 %s141, %s150
          %s152 = smul.addr %s151, 32
          %s153 = scalar_lea.hbm %s0, %s152
          %s154 = smul.u32 %s144, 2
          %s155 = sshll.u32 %s154, 4
          %s156 = sshll.u32 %s140, 4
          %s157 = int_to_ptr.vmem [resolvable:$true] %s156
          %159 = dma.hbm_to_vmem [thread:$0]  (%p149), %s153, %s155, %s157, %s137
        $region20: #{tpu_custom_call.1} parent=15 // pred_fallthru
          _
      $region16: #{tpu_custom_call.1} parent=5 // pred_fallthru
        _
      %p160 = scmp.le.s32.totalorder 1, %s18
      %p161 = scmp.lt.s32.totalorder %s18, 5
      %p162 = pnand %p160, %p161
      %p163 = pneg %p162
      // Predicated region
      $region21: #{tpu_custom_call.1} parent=5 // pred_check
        _
      $region22: #{tpu_custom_call.1} parent=5 // pred_check_branch
        %165 = sbr.rel (%p162) target = $region24
      $region23: #{tpu_custom_call.1} parent=5 // pred_region
        %s166 = ssub.s32 %s18, 1
        %s167 = sand.u32 %s45, 1
        %s168 = scalar_lea.sflag [#allocation3], %s167
        %s169 = sand.u32 %s45, 1
        %s170 = smul.addr %s169, 512
        %s171 = scalar_lea.vmem [#allocation2], %s170
        // Predicated region
        $region25: #{tpu_custom_call.1} parent=23 // pred_check
          %p172 = pneg %p58
        $region26: #{tpu_custom_call.1} parent=23 // pred_check_branch
          %174 = sbr.rel (%p172) target = $region28
        $region27: #{tpu_custom_call.1} parent=23 // pred_region
          %175 = dma.done %s168, 8192
        $region28: #{tpu_custom_call.1} parent=23 // pred_fallthru
          _
        %s176 = sand.u32 %s45, 1
        %s177 = scalar_lea.sflag [#allocation3], %s176
        %s178 = sand.u32 %s45, 1
        %s179 = smul.addr %s178, 512
        %s180 = scalar_lea.vmem [#allocation2], %s179
        %p181 = pneg %p58
        %p182 = pneg %p55
        %p183 = pneg %p86
        %p184 = pneg %p83
        %s185 = sand.u32 %s73, 1
        %s186 = scalar_lea.sflag [#allocation4], %s185
        %s187 = sand.u32 %s73, 1
        %s188 = smul.addr %s187, 256
        %s189 = scalar_lea.vmem [#allocation5], %s188
        %p190 = pneg %p114
        %p191 = pneg %p111
        %s192 = sand.u32 %s101, 1
        %s193 = scalar_lea.sflag [#allocation7], %s192
        %s194 = sand.u32 %s101, 1
        %s195 = smul.addr %s194, 256
        %s196 = scalar_lea.vmem [#allocation6], %s195
        %s197 = smul.u32 256, %s28
        %s198 = ssub.s32 375, %s197
        %p199 = scmp.lt.s32.totalorder %s198, 256
        %s200 = scalar_select %p199, %s198, 256
        %s201 = smul.u32 32, %s200
        %s202 = smul.u32 256, %s28
        %s203 = ssub.s32 375, %s202
        %p204 = scmp.lt.s32.totalorder %s203, 256
        %s205 = scalar_select %p204, %s203, 256
        %s206 = smul.u32 16, %s205
        %s207 = smul.u32 256, %s28
        %s208 = ssub.s32 375, %s207
        %p209 = scmp.lt.s32.totalorder %s208, 256
        %s210 = scalar_select %p209, %s208, 256
        %s211 = smul.u32 16, %s210
        %v212 = vld [vmem:[%s171] ss:$2 sm:$0xff]
        %s213 = scalar_lea.vmem %s171, 16 [#allocation2]
        %v214 = vld [vmem:[%s213] ss:$2 sm:$0xff]
        %s215 = scalar_lea.vmem %s171, 32 [#allocation2]
        %v216 = vld [vmem:[%s215] ss:$2 sm:$0xff]
        %s217 = scalar_lea.vmem %s171, 48 [#allocation2]
        %v218 = vld [vmem:[%s217] ss:$2 sm:$0xff]
        %s219 = scalar_lea.vmem %s171, 64 [#allocation2]
        %v220 = vld [vmem:[%s219] ss:$2 sm:$0xff]
        %s221 = scalar_lea.vmem %s171, 80 [#allocation2]
        %v222 = vld [vmem:[%s221] ss:$2 sm:$0xff]
        %s223 = scalar_lea.vmem %s171, 96 [#allocation2]
        %v224 = vld [vmem:[%s223] ss:$2 sm:$0xff]
        %s225 = scalar_lea.vmem %s171, 112 [#allocation2]
        %v226 = vld [vmem:[%s225] ss:$2 sm:$0xff]
        %s227 = scalar_lea.vmem %s171, 128 [#allocation2]
        %v228 = vld [vmem:[%s227] ss:$2 sm:$0xff]
        %s229 = scalar_lea.vmem %s171, 144 [#allocation2]
        %v230 = vld [vmem:[%s229] ss:$2 sm:$0xff]
        %s231 = scalar_lea.vmem %s171, 160 [#allocation2]
        %v232 = vld [vmem:[%s231] ss:$2 sm:$0xff]
        %s233 = scalar_lea.vmem %s171, 176 [#allocation2]
        %v234 = vld [vmem:[%s233] ss:$2 sm:$0xff]
        %s235 = scalar_lea.vmem %s171, 192 [#allocation2]
        %v236 = vld [vmem:[%s235] ss:$2 sm:$0xff]
        %s237 = scalar_lea.vmem %s171, 208 [#allocation2]
        %v238 = vld [vmem:[%s237] ss:$2 sm:$0xff]
        %s239 = scalar_lea.vmem %s171, 224 [#allocation2]
        %v240 = vld [vmem:[%s239] ss:$2 sm:$0xff]
        %s241 = scalar_lea.vmem %s171, 240 [#allocation2]
        %v242 = vld [vmem:[%s241] ss:$2 sm:$0xff]
        %s243 = scalar_lea.vmem %s171, 256 [#allocation2]
        %v244 = vld [vmem:[%s243] ss:$2 sm:$0xff]
        %s245 = scalar_lea.vmem %s171, 272 [#allocation2]
        %v246 = vld [vmem:[%s245] ss:$2 sm:$0xff]
        %s247 = scalar_lea.vmem %s171, 288 [#allocation2]
        %v248 = vld [vmem:[%s247] ss:$2 sm:$0xff]
        %s249 = scalar_lea.vmem %s171, 304 [#allocation2]
        %v250 = vld [vmem:[%s249] ss:$2 sm:$0xff]
        %s251 = scalar_lea.vmem %s171, 320 [#allocation2]
        %v252 = vld [vmem:[%s251] ss:$2 sm:$0xff]
        %s253 = scalar_lea.vmem %s171, 336 [#allocation2]
        %v254 = vld [vmem:[%s253] ss:$2 sm:$0xff]
        %s255 = scalar_lea.vmem %s171, 352 [#allocation2]
        %v256 = vld [vmem:[%s255] ss:$2 sm:$0xff]
        %s257 = scalar_lea.vmem %s171, 368 [#allocation2]
        %v258 = vld [vmem:[%s257] ss:$2 sm:$0xff]
        %s259 = scalar_lea.vmem %s171, 384 [#allocation2]
        %v260 = vld [vmem:[%s259] ss:$2 sm:$0xff]
        %s261 = scalar_lea.vmem %s171, 400 [#allocation2]
        %v262 = vld [vmem:[%s261] ss:$2 sm:$0xff]
        %s263 = scalar_lea.vmem %s171, 416 [#allocation2]
        %v264 = vld [vmem:[%s263] ss:$2 sm:$0xff]
        %s265 = scalar_lea.vmem %s171, 432 [#allocation2]
        %v266 = vld [vmem:[%s265] ss:$2 sm:$0xff]
        %s267 = scalar_lea.vmem %s171, 448 [#allocation2]
        %v268 = vld [vmem:[%s267] ss:$2 sm:$0xff]
        %s269 = scalar_lea.vmem %s171, 464 [#allocation2]
        %v270 = vld [vmem:[%s269] ss:$2 sm:$0xff]
        %s271 = scalar_lea.vmem %s171, 480 [#allocation2]
        %v272 = vld [vmem:[%s271] ss:$2 sm:$0xff]
        %s273 = scalar_lea.vmem %s171, 496 [#allocation2]
        %v274 = vld [vmem:[%s273] ss:$2 sm:$0xff]
        %s275 = scalar_lea.vmem %s171, 1 [#allocation2]
        %v276 = vld [vmem:[%s275] ss:$2 sm:$0xff]
        %s277 = scalar_lea.vmem %s171, 17 [#allocation2]
        %v278 = vld [vmem:[%s277] ss:$2 sm:$0xff]
        %s279 = scalar_lea.vmem %s171, 33 [#allocation2]
        %v280 = vld [vmem:[%s279] ss:$2 sm:$0xff]
        %s281 = scalar_lea.vmem %s171, 49 [#allocation2]
        %v282 = vld [vmem:[%s281] ss:$2 sm:$0xff]
        %s283 = scalar_lea.vmem %s171, 65 [#allocation2]
        %v284 = vld [vmem:[%s283] ss:$2 sm:$0xff]
        %s285 = scalar_lea.vmem %s171, 81 [#allocation2]
        %v286 = vld [vmem:[%s285] ss:$2 sm:$0xff]
        %s287 = scalar_lea.vmem %s171, 97 [#allocation2]
        %v288 = vld [vmem:[%s287] ss:$2 sm:$0xff]
        %s289 = scalar_lea.vmem %s171, 113 [#allocation2]
        %v290 = vld [vmem:[%s289] ss:$2 sm:$0xff]
        %s291 = scalar_lea.vmem %s171, 129 [#allocation2]
        %v292 = vld [vmem:[%s291] ss:$2 sm:$0xff]
        %s293 = scalar_lea.vmem %s171, 145 [#allocation2]
        %v294 = vld [vmem:[%s293] ss:$2 sm:$0xff]
        %s295 = scalar_lea.vmem %s171, 161 [#allocation2]
        %v296 = vld [vmem:[%s295] ss:$2 sm:$0xff]
        %s297 = scalar_lea.vmem %s171, 177 [#allocation2]
        %v298 = vld [vmem:[%s297] ss:$2 sm:$0xff]
        %s299 = scalar_lea.vmem %s171, 193 [#allocation2]
        %v300 = vld [vmem:[%s299] ss:$2 sm:$0xff]
        %s301 = scalar_lea.vmem %s171, 209 [#allocation2]
        %v302 = vld [vmem:[%s301] ss:$2 sm:$0xff]
        %s303 = scalar_lea.vmem %s171, 225 [#allocation2]
        %v304 = vld [vmem:[%s303] ss:$2 sm:$0xff]
        %s305 = scalar_lea.vmem %s171, 241 [#allocation2]
        %v306 = vld [vmem:[%s305] ss:$2 sm:$0xff]
        %s307 = scalar_lea.vmem %s171, 257 [#allocation2]
        %v308 = vld [vmem:[%s307] ss:$2 sm:$0xff]
        %s309 = scalar_lea.vmem %s171, 273 [#allocation2]
        %v310 = vld [vmem:[%s309] ss:$2 sm:$0xff]
        %s311 = scalar_lea.vmem %s171, 289 [#allocation2]
        %v312 = vld [vmem:[%s311] ss:$2 sm:$0xff]
        %s313 = scalar_lea.vmem %s171, 305 [#allocation2]
        %v314 = vld [vmem:[%s313] ss:$2 sm:$0xff]
        %s315 = scalar_lea.vmem %s171, 321 [#allocation2]
        %v316 = vld [vmem:[%s315] ss:$2 sm:$0xff]
        %s317 = scalar_lea.vmem %s171, 337 [#allocation2]
        %v318 = vld [vmem:[%s317] ss:$2 sm:$0xff]
        %s319 = scalar_lea.vmem %s171, 353 [#allocation2]
        %v320 = vld [vmem:[%s319] ss:$2 sm:$0xff]
        %s321 = scalar_lea.vmem %s171, 369 [#allocation2]
        %v322 = vld [vmem:[%s321] ss:$2 sm:$0xff]
        %s323 = scalar_lea.vmem %s171, 385 [#allocation2]
        %v324 = vld [vmem:[%s323] ss:$2 sm:$0xff]
        %s325 = scalar_lea.vmem %s171, 401 [#allocation2]
        %v326 = vld [vmem:[%s325] ss:$2 sm:$0xff]
        %s327 = scalar_lea.vmem %s171, 417 [#allocation2]
        %v328 = vld [vmem:[%s327] ss:$2 sm:$0xff]
        %s329 = scalar_lea.vmem %s171, 433 [#allocation2]
        %v330 = vld [vmem:[%s329] ss:$2 sm:$0xff]
        %s331 = scalar_lea.vmem %s171, 449 [#allocation2]
        %v332 = vld [vmem:[%s331] ss:$2 sm:$0xff]
        %s333 = scalar_lea.vmem %s171, 465 [#allocation2]
        %v334 = vld [vmem:[%s333] ss:$2 sm:$0xff]
        %s335 = scalar_lea.vmem %s171, 481 [#allocation2]
        %v336 = vld [vmem:[%s335] ss:$2 sm:$0xff]
        %s337 = scalar_lea.vmem %s171, 497 [#allocation2]
        %v338 = vld [vmem:[%s337] ss:$2 sm:$0xff]
        %v339 = vmul.f32 %v212, 0.70710677
        %v340 = vmul.f32 %v214, 0.70710677
        %v341 = vmul.f32 %v216, 0.70710677
        %v342 = vmul.f32 %v218, 0.70710677
        %v343 = vmul.f32 %v220, 0.70710677
        %v344 = vmul.f32 %v222, 0.70710677
        %v345 = vmul.f32 %v224, 0.70710677
        %v346 = vmul.f32 %v226, 0.70710677
        %v347 = vmul.f32 %v228, 0.70710677
        %v348 = vmul.f32 %v230, 0.70710677
        %v349 = vmul.f32 %v232, 0.70710677
        %v350 = vmul.f32 %v234, 0.70710677
        %v351 = vmul.f32 %v236, 0.70710677
        %v352 = vmul.f32 %v238, 0.70710677
        %v353 = vmul.f32 %v240, 0.70710677
        %v354 = vmul.f32 %v242, 0.70710677
        %v355 = vmul.f32 %v244, 0.70710677
        %v356 = vmul.f32 %v246, 0.70710677
        %v357 = vmul.f32 %v248, 0.70710677
        %v358 = vmul.f32 %v250, 0.70710677
        %v359 = vmul.f32 %v252, 0.70710677
        %v360 = vmul.f32 %v254, 0.70710677
        %v361 = vmul.f32 %v256, 0.70710677
        %v362 = vmul.f32 %v258, 0.70710677
        %v363 = vmul.f32 %v260, 0.70710677
        %v364 = vmul.f32 %v262, 0.70710677
        %v365 = vmul.f32 %v264, 0.70710677
        %v366 = vmul.f32 %v266, 0.70710677
        %v367 = vmul.f32 %v268, 0.70710677
        %v368 = vmul.f32 %v270, 0.70710677
        %v369 = vmul.f32 %v272, 0.70710677
        %v370 = vmul.f32 %v274, 0.70710677
        %v371 = vmul.f32 %v276, 0.70710677
        %v372 = vmul.f32 %v278, 0.70710677
        %v373 = vmul.f32 %v280, 0.70710677
        %v374 = vmul.f32 %v282, 0.70710677
        %v375 = vmul.f32 %v284, 0.70710677
        %v376 = vmul.f32 %v286, 0.70710677
        %v377 = vmul.f32 %v288, 0.70710677
        %v378 = vmul.f32 %v290, 0.70710677
        %v379 = vmul.f32 %v292, 0.70710677
        %v380 = vmul.f32 %v294, 0.70710677
        %v381 = vmul.f32 %v296, 0.70710677
        %v382 = vmul.f32 %v298, 0.70710677
        %v383 = vmul.f32 %v300, 0.70710677
        %v384 = vmul.f32 %v302, 0.70710677
        %v385 = vmul.f32 %v304, 0.70710677
        %v386 = vmul.f32 %v306, 0.70710677
        %v387 = vmul.f32 %v308, 0.70710677
        %v388 = vmul.f32 %v310, 0.70710677
        %v389 = vmul.f32 %v312, 0.70710677
        %v390 = vmul.f32 %v314, 0.70710677
        %v391 = vmul.f32 %v316, 0.70710677
        %v392 = vmul.f32 %v318, 0.70710677
        %v393 = vmul.f32 %v320, 0.70710677
        %v394 = vmul.f32 %v322, 0.70710677
        %v395 = vmul.f32 %v324, 0.70710677
        %v396 = vmul.f32 %v326, 0.70710677
        %v397 = vmul.f32 %v328, 0.70710677
        %v398 = vmul.f32 %v330, 0.70710677
        %v399 = vmul.f32 %v332, 0.70710677
        %v400 = vmul.f32 %v334, 0.70710677
        %v401 = vmul.f32 %v336, 0.70710677
        %v402 = vmul.f32 %v338, 0.70710677
        %v403 = vadd.f32 %v339, %v371
        %v404 = vadd.f32 %v340, %v372
        %v405 = vadd.f32 %v341, %v373
        %v406 = vadd.f32 %v342, %v374
        %v407 = vadd.f32 %v343, %v375
        %v408 = vadd.f32 %v344, %v376
        %v409 = vadd.f32 %v345, %v377
        %v410 = vadd.f32 %v346, %v378
        %v411 = vadd.f32 %v347, %v379
        %v412 = vadd.f32 %v348, %v380
        %v413 = vadd.f32 %v349, %v381
        %v414 = vadd.f32 %v350, %v382
        %v415 = vadd.f32 %v351, %v383
        %v416 = vadd.f32 %v352, %v384
        %v417 = vadd.f32 %v353, %v385
        %v418 = vadd.f32 %v354, %v386
        %v419 = vadd.f32 %v355, %v387
        %v420 = vadd.f32 %v356, %v388
        %v421 = vadd.f32 %v357, %v389
        %v422 = vadd.f32 %v358, %v390
        %v423 = vadd.f32 %v359, %v391
        %v424 = vadd.f32 %v360, %v392
        %v425 = vadd.f32 %v361, %v393
        %v426 = vadd.f32 %v362, %v394
        %v427 = vadd.f32 %v363, %v395
        %v428 = vadd.f32 %v364, %v396
        %v429 = vadd.f32 %v365, %v397
        %v430 = vadd.f32 %v366, %v398
        %v431 = vadd.f32 %v367, %v399
        %v432 = vadd.f32 %v368, %v400
        %v433 = vadd.f32 %v369, %v401
        %v434 = vadd.f32 %v370, %v402
        %435 = vst [vmem:[%s189] sm:$0xff] %v403
        %436 = vst [vmem:[%s189 + $0x8] sm:$0xff] %v404
        %437 = vst [vmem:[%s189 + $0x10] sm:$0xff] %v405
        %438 = vst [vmem:[%s189 + $0x18] sm:$0xff] %v406
        %439 = vst [vmem:[%s189 + $0x20] sm:$0xff] %v407
        %440 = vst [vmem:[%s189 + $0x28] sm:$0xff] %v408
        %441 = vst [vmem:[%s189 + $0x30] sm:$0xff] %v409
        %442 = vst [vmem:[%s189 + $0x38] sm:$0xff] %v410
        %443 = vst [vmem:[%s189 + $0x40] sm:$0xff] %v411
        %444 = vst [vmem:[%s189 + $0x48] sm:$0xff] %v412
        %445 = vst [vmem:[%s189 + $0x50] sm:$0xff] %v413
        %446 = vst [vmem:[%s189 + $0x58] sm:$0xff] %v414
        %447 = vst [vmem:[%s189 + $0x60] sm:$0xff] %v415
        %448 = vst [vmem:[%s189 + $0x68] sm:$0xff] %v416
        %449 = vst [vmem:[%s189 + $0x70] sm:$0xff] %v417
        %450 = vst [vmem:[%s189 + $0x78] sm:$0xff] %v418
        %451 = vst [vmem:[%s189 + $0x80] sm:$0xff] %v419
        %452 = vst [vmem:[%s189 + $0x88] sm:$0xff] %v420
        %453 = vst [vmem:[%s189 + $0x90] sm:$0xff] %v421
        %454 = vst [vmem:[%s189 + $0x98] sm:$0xff] %v422
        %455 = vst [vmem:[%s189 + $0xa0] sm:$0xff] %v423
        %456 = vst [vmem:[%s189 + $0xa8] sm:$0xff] %v424
        %457 = vst [vmem:[%s189 + $0xb0] sm:$0xff] %v425
        %458 = vst [vmem:[%s189 + $0xb8] sm:$0xff] %v426
        %459 = vst [vmem:[%s189 + $0xc0] sm:$0xff] %v427
        %460 = vst [vmem:[%s189 + $0xc8] sm:$0xff] %v428
        %461 = vst [vmem:[%s189 + $0xd0] sm:$0xff] %v429
        %462 = vst [vmem:[%s189 + $0xd8] sm:$0xff] %v430
        %463 = vst [vmem:[%s189 + $0xe0] sm:$0xff] %v431
        %464 = vst [vmem:[%s189 + $0xe8] sm:$0xff] %v432
        %465 = vst [vmem:[%s189 + $0xf0] sm:$0xff] %v433
        %466 = vst [vmem:[%s189 + $0xf8] sm:$0xff] %v434
        %v467 = vsub.f32 %v339, %v371
        %v468 = vsub.f32 %v340, %v372
        %v469 = vsub.f32 %v341, %v373
        %v470 = vsub.f32 %v342, %v374
        %v471 = vsub.f32 %v343, %v375
        %v472 = vsub.f32 %v344, %v376
        %v473 = vsub.f32 %v345, %v377
        %v474 = vsub.f32 %v346, %v378
        %v475 = vsub.f32 %v347, %v379
        %v476 = vsub.f32 %v348, %v380
        %v477 = vsub.f32 %v349, %v381
        %v478 = vsub.f32 %v350, %v382
        %v479 = vsub.f32 %v351, %v383
        %v480 = vsub.f32 %v352, %v384
        %v481 = vsub.f32 %v353, %v385
        %v482 = vsub.f32 %v354, %v386
        %v483 = vsub.f32 %v355, %v387
        %v484 = vsub.f32 %v356, %v388
        %v485 = vsub.f32 %v357, %v389
        %v486 = vsub.f32 %v358, %v390
        %v487 = vsub.f32 %v359, %v391
        %v488 = vsub.f32 %v360, %v392
        %v489 = vsub.f32 %v361, %v393
        %v490 = vsub.f32 %v362, %v394
        %v491 = vsub.f32 %v363, %v395
        %v492 = vsub.f32 %v364, %v396
        %v493 = vsub.f32 %v365, %v397
        %v494 = vsub.f32 %v366, %v398
        %v495 = vsub.f32 %v367, %v399
        %v496 = vsub.f32 %v368, %v400
        %v497 = vsub.f32 %v369, %v401
        %v498 = vsub.f32 %v370, %v402
        %499 = vst [vmem:[%s196] sm:$0xff] %v467
        %500 = vst [vmem:[%s196 + $0x8] sm:$0xff] %v468
        %501 = vst [vmem:[%s196 + $0x10] sm:$0xff] %v469
        %502 = vst [vmem:[%s196 + $0x18] sm:$0xff] %v470
        %503 = vst [vmem:[%s196 + $0x20] sm:$0xff] %v471
        %504 = vst [vmem:[%s196 + $0x28] sm:$0xff] %v472
        %505 = vst [vmem:[%s196 + $0x30] sm:$0xff] %v473
        %506 = vst [vmem:[%s196 + $0x38] sm:$0xff] %v474
        %507 = vst [vmem:[%s196 + $0x40] sm:$0xff] %v475
        %508 = vst [vmem:[%s196 + $0x48] sm:$0xff] %v476
        %509 = vst [vmem:[%s196 + $0x50] sm:$0xff] %v477
        %510 = vst [vmem:[%s196 + $0x58] sm:$0xff] %v478
        %511 = vst [vmem:[%s196 + $0x60] sm:$0xff] %v479
        %512 = vst [vmem:[%s196 + $0x68] sm:$0xff] %v480
        %513 = vst [vmem:[%s196 + $0x70] sm:$0xff] %v481
        %514 = vst [vmem:[%s196 + $0x78] sm:$0xff] %v482
        %515 = vst [vmem:[%s196 + $0x80] sm:$0xff] %v483
        %516 = vst [vmem:[%s196 + $0x88] sm:$0xff] %v484
        %517 = vst [vmem:[%s196 + $0x90] sm:$0xff] %v485
        %518 = vst [vmem:[%s196 + $0x98] sm:$0xff] %v486
        %519 = vst [vmem:[%s196 + $0xa0] sm:$0xff] %v487
        %520 = vst [vmem:[%s196 + $0xa8] sm:$0xff] %v488
        %521 = vst [vmem:[%s196 + $0xb0] sm:$0xff] %v489
        %522 = vst [vmem:[%s196 + $0xb8] sm:$0xff] %v490
        %523 = vst [vmem:[%s196 + $0xc0] sm:$0xff] %v491
        %524 = vst [vmem:[%s196 + $0xc8] sm:$0xff] %v492
        %525 = vst [vmem:[%s196 + $0xd0] sm:$0xff] %v493
        %526 = vst [vmem:[%s196 + $0xd8] sm:$0xff] %v494
        %527 = vst [vmem:[%s196 + $0xe0] sm:$0xff] %v495
        %528 = vst [vmem:[%s196 + $0xe8] sm:$0xff] %v496
        %529 = vst [vmem:[%s196 + $0xf0] sm:$0xff] %v497
        %530 = vst [vmem:[%s196 + $0xf8] sm:$0xff] %v498
        %s531 = sand.u32 %s73, 1
        %s532 = scalar_lea.sflag [#allocation4], %s531
        %s533 = sand.u32 %s73, 1
        %s534 = smul.addr %s533, 256
        %s535 = scalar_lea.vmem [#allocation5], %s534
        %s536 = sand.u32 %s101, 1
        %s537 = scalar_lea.sflag [#allocation7], %s536
        %s538 = sand.u32 %s101, 1
        %s539 = smul.addr %s538, 256
        %s540 = scalar_lea.vmem [#allocation6], %s539
        // Predicated region
        $region29: #{tpu_custom_call.1} parent=23 // pred_check
          %p541 = pneg %p83
        $region30: #{tpu_custom_call.1} parent=23 // pred_check_branch
          %543 = sbr.rel (%p541) target = $region32
        $region31: #{tpu_custom_call.1} parent=23 // pred_region
          %s544 = smul.u32 256, %s28
          %s545 = ssub.s32 375, %s544
          %p546 = scmp.lt.s32.totalorder %s545, 256
          %s547 = scalar_select %p546, %s545, 256
          %s548 = smul.u32 16, %s547
          %s550 = ssub.s32 4096, %s548
          %551 = vsyncadd %s532, %s550
          %p552 = scmp.ne.s32.totalorder 0, %s548
          %s553 = smul.addr %s27, 375
          %s554 = sadd.s32 %s544, %s553
          %s555 = smul.addr %s554, 16
          %s556 = scalar_lea.hbm %s1, %s555
          %s557 = sshll.u32 %s547, 4
          %s558 = sshll.u32 %s535, 4
          %s559 = int_to_ptr.vmem [resolvable:$true] %s558
          %561 = dma.vmem_to_hbm [thread:$0]  (%p552), %s559, %s557, %s556, %s532
        $region32: #{tpu_custom_call.1} parent=23 // pred_fallthru
          _
        // Predicated region
        $region33: #{tpu_custom_call.1} parent=23 // pred_check
          %p562 = pneg %p111
        $region34: #{tpu_custom_call.1} parent=23 // pred_check_branch
          %564 = sbr.rel (%p562) target = $region36
        $region35: #{tpu_custom_call.1} parent=23 // pred_region
          %s565 = smul.u32 256, %s28
          %s566 = ssub.s32 375, %s565
          %p567 = scmp.lt.s32.totalorder %s566, 256
          %s568 = scalar_select %p567, %s566, 256
          %s569 = smul.u32 16, %s568
          %s571 = ssub.s32 4096, %s569
          %572 = vsyncadd %s537, %s571
          %p573 = scmp.ne.s32.totalorder 0, %s569
          %s574 = smul.addr %s27, 375
          %s575 = sadd.s32 %s565, %s574
          %s576 = smul.addr %s575, 16
          %s577 = scalar_lea.hbm %s2, %s576
          %s578 = sshll.u32 %s568, 4
          %s579 = sshll.u32 %s540, 4
          %s580 = int_to_ptr.vmem [resolvable:$true] %s579
          %582 = dma.vmem_to_hbm [thread:$0]  (%p573), %s580, %s578, %s577, %s537
        $region36: #{tpu_custom_call.1} parent=23 // pred_fallthru
          _
      $region24: #{tpu_custom_call.1} parent=5 // pred_fallthru
        _
      %p583 = scmp.le.s32.totalorder 2, %s18
      // Predicated region
      $region37: #{tpu_custom_call.1} parent=5 // pred_check
        %p584 = pneg %p583
      $region38: #{tpu_custom_call.1} parent=5 // pred_check_branch
        %586 = sbr.rel (%p584) target = $region40
      $region39: #{tpu_custom_call.1} parent=5 // pred_region
        %s587 = ssub.s32 %s18, 2
        // Predicated region
        $region41: #{tpu_custom_call.1} parent=39 // pred_check
          %p588 = pneg %p89
        $region42: #{tpu_custom_call.1} parent=39 // pred_check_branch
          %590 = sbr.rel (%p588) target = $region44
        $region43: #{tpu_custom_call.1} parent=39 // pred_region
          %s591 = sand.u32 %s74, 1
          %s592 = scalar_lea.sflag [#allocation4], %s591
          %s593 = sand.u32 %s74, 1
          %s594 = smul.addr %s593, 256
          %s595 = scalar_lea.vmem [#allocation5], %s594
          %596 = dma.done %s592, 4096
        $region44: #{tpu_custom_call.1} parent=39 // pred_fallthru
          _
        // Predicated region
        $region45: #{tpu_custom_call.1} parent=39 // pred_check
          %p597 = pneg %p117
        $region46: #{tpu_custom_call.1} parent=39 // pred_check_branch
          %599 = sbr.rel (%p597) target = $region48
        $region47: #{tpu_custom_call.1} parent=39 // pred_region
          %s600 = sand.u32 %s102, 1
          %s601 = scalar_lea.sflag [#allocation7], %s600
          %s602 = sand.u32 %s102, 1
          %s603 = smul.addr %s602, 256
          %s604 = scalar_lea.vmem [#allocation6], %s603
          %605 = dma.done %s601, 4096
        $region48: #{tpu_custom_call.1} parent=39 // pred_fallthru
          _
      $region40: #{tpu_custom_call.1} parent=5 // pred_fallthru
        _
    $region6: #{tpu_custom_call.1} parent=1 // loop_footer
      %s22 = sadd.s32 1, %s18
    $region7: #{tpu_custom_call.1} parent=1 // loop_footer_branch
      %17 = sbr.rel target = $region3
    $region8: #{tpu_custom_call.1} parent=1 // loop_exit
      _
    %606 = vsyncpa [#allocation3], 1
    %s607 = scalar_lea.sflag [#allocation3], 1
    %608 = vsyncpa %s607, 1
    %609 = vsyncpa [#allocation4], 1
    %s610 = scalar_lea.sflag [#allocation4], 1
    %611 = vsyncpa %s610, 1
    %612 = vsyncpa [#allocation7], 1
    %s613 = scalar_lea.sflag [#allocation7], 1
    %614 = vsyncpa %s613, 1

</llo_original>
